<compile_context>
chip_gen: v7x
topology: tpu7x:2x2x1
jax: 0.10.0
libtpu: 0.0.40
codegen_flags: <defaults>
</compile_context>

<pallas_src>
import jax
import jax.numpy as jnp
from jax.experimental import pallas as pl
from jax.experimental.pallas import tpu as pltpu


def _round_up(x: int, m: int) -> int:
    return (x + m - 1) // m * m


def _dft_cos_sin(m: int):
    """DFT cos/sin matrices C[k,n]=cos(2*pi*k*n/m), S[k,n]=sin(2*pi*k*n/m)."""
    k = jnp.arange(m, dtype=jnp.int32)
    prod = (k[:, None] * k[None, :]) % m              # keep angles in [0, 2*pi)
    ang = prod.astype(jnp.float32) * (jnp.float32(2.0 * jnp.pi) / m)
    return jnp.cos(ang), jnp.sin(ang)


def _fnet_kernel(x_ref, cdsd_ref, cn_ref, sn_ref, o_ref, y_ref):
    # x_ref    : (TB, Np, Dp)    bf16  -- batch block, full padded seq & hidden
    # cdsd_ref : (Dp, 2*Dp)      bf16  -- [C_D | -S_D], VMEM-resident constant
    # cn_ref   : (TN, Np)        bf16  -- row panel of C_N
    # sn_ref   : (TN, Np)        bf16  -- row panel of S_N
    # o_ref    : (TB, TN, Dp)    f32   -- output block
    # y_ref    : (TB, Np, 2*Dp)  bf16  -- scratch: stage-1 result [yr | yi]
    tb, npad, dpad = x_ref.shape

    # Stage 1 (FFT along hidden dim): one fused bf16 matmul for the whole
    # batch block, computed once and cached across the sequence panel axis.
    @pl.when(pl.program_id(1) == 0)
    def _():
        x2 = x_ref[...].reshape(tb * npad, dpad)                   # (TB*Np, Dp)
        y = jnp.dot(x2, cdsd_ref[...],
                    preferred_element_type=jnp.float32)            # (TB*Np, 2Dp)
        y_ref[...] = y.reshape(tb, npad, 2 * dpad).astype(y_ref.dtype)

    # Stage 2 (real part of FFT along sequence dim) for this row panel.
    cn = cn_ref[...]
    sn = sn_ref[...]
    for b in range(tb):                                            # static unroll
        yb = y_ref[b]                                              # (Np, 2*Dp)
        yr = yb[:, :dpad]
        yi = yb[:, dpad:]
        o_ref[b] = (jnp.dot(cn, yr, preferred_element_type=jnp.float32)
                    + jnp.dot(sn, yi, preferred_element_type=jnp.float32)
                    ).astype(o_ref.dtype)


def fnet_block(x: jax.Array) -> jax.Array:
    """x: (B, N, D) real array. Returns fft(fft(x, dim=-1), dim=-2).real (f32)."""
    B, N, D = x.shape

    # ---- padded / tiled sizes ----------------------------------------------
    Dp = _round_up(D, 128)                   # lane-dense hidden dim
    Np = _round_up(max(N, 16), 16)           # bf16 sublane tile
    if Np > 1024:                            # row-panel the sequence stage
        TN = 256
        Np = _round_up(Np, TN)
    else:
        TN = Np
    n_panels = Np // TN
    TB = min(8, max(1, min(B, 256 // Np)))   # batch elems per grid step
    Bp = _round_up(B, TB)
    n_bblocks = Bp // TB

    # ---- DFT constants (exact f32 angles, bf16 storage) ---------------------
    cd, sd = _dft_cos_sin(D)
    cn, sn = _dft_cos_sin(N)
    cdsd = jnp.zeros((Dp, 2 * Dp), jnp.float32)
    cdsd = cdsd.at[:D, :D].set(cd).at[:D, Dp:Dp + D].set(-sd)      # [C_D | -S_D]
    cn_p = jnp.zeros((Np, Np), jnp.float32).at[:N, :N].set(cn)
    sn_p = jnp.zeros((Np, Np), jnp.float32).at[:N, :N].set(sn)

    xp = jnp.zeros((Bp, Np, Dp), jnp.float32).at[:B, :N, :D].set(
        x.astype(jnp.float32))

    xp = xp.astype(jnp.bfloat16)
    cdsd = cdsd.astype(jnp.bfloat16)
    cn_p = cn_p.astype(jnp.bfloat16)
    sn_p = sn_p.astype(jnp.bfloat16)

    # ---- explicit VMEM budget (actual buffers + headroom) --------------------
    vmem_bytes = (
        2 * TB * Np * Dp * 2          # x block, double buffered, bf16
        + 2 * TB * TN * Dp * 4        # out block, double buffered, f32
        + Dp * (2 * Dp) * 2           # [C_D | -S_D], single resident copy, bf16
        + 2 * 2 * TN * Np * 2         # C_N / S_N panels, double buffered, bf16
        + TB * Np * (2 * Dp) * 2      # stage-1 scratch, bf16
    )
    vmem_limit = int(min(100 * 1024 * 1024,
                         max(32 * 1024 * 1024, 2 * vmem_bytes)))

    out = pl.pallas_call(
        _fnet_kernel,
        out_shape=jax.ShapeDtypeStruct((Bp, Np, Dp), jnp.float32),
        grid_spec=pltpu.PrefetchScalarGridSpec(
            num_scalar_prefetch=0,
            grid=(n_bblocks, n_panels),
            in_specs=[
                pl.BlockSpec((TB, Np, Dp), lambda i, j: (i, 0, 0)),    # x
                pl.BlockSpec(memory_space=pltpu.MemorySpace.VMEM),     # [C_D|-S_D]
                pl.BlockSpec((TN, Np), lambda i, j: (j, 0)),           # C_N panel
                pl.BlockSpec((TN, Np), lambda i, j: (j, 0)),           # S_N panel
            ],
            out_specs=pl.BlockSpec((TB, TN, Dp), lambda i, j: (i, j, 0)),
            scratch_shapes=[pltpu.VMEM((TB, Np, 2 * Dp), jnp.bfloat16)],
        ),
        compiler_params=pltpu.CompilerParams(
            # batch blocks are independent (megacore-parallel); the sequence
            # row-panel axis reuses the stage-1 scratch, so it is "arbitrary".
            dimension_semantics=("parallel", "arbitrary"),
            vmem_limit_bytes=vmem_limit,
        ),
    )(xp, cdsd, cn_p, sn_p)

    return out[:B, :N, :D]


if __name__ == "__main__":
    key = jax.random.PRNGKey(0)
    B, N, D = 2, 8, 32  # batch, sequence, hidden
    x = jax.random.normal(key, (B, N, D), dtype=jnp.float32)

    out = jax.block_until_ready(fnet_block(x))

    # Reference check against jnp.fft (same semantics as torch.fft).
    ref = jnp.fft.fft(jnp.fft.fft(x, axis=-1), axis=-2).real
    assert out.shape == ref.shape and out.dtype == jnp.float32
    # bf16 matmuls with f32 accumulation -> loosened tolerance on O(sqrt(N*D)) values.
    max_err = float(jnp.max(jnp.abs(out - ref)))
    assert jnp.allclose(out, ref, atol=1.0, rtol=5e-2), (
        f"mismatch vs jnp.fft reference (max|err|={max_err:.4f})")
    print("KERNEL_OK")
</pallas_src>

<mosaic_0001>
module attributes {stable_mosaic.version = 11 : i64} {
  func.func @_fnet_kernel(%arg0: i32, %arg1: i32, %arg2: memref<2x16x128xbf16, #tpu.memory_space<vmem>>, %arg3: memref<128x256xbf16, #tpu.memory_space<vmem>>, %arg4: memref<16x16xbf16, #tpu.memory_space<vmem>>, %arg5: memref<16x16xbf16, #tpu.memory_space<vmem>>, %arg6: memref<2x16x128xf32, #tpu.memory_space<vmem>>, %arg7: memref<2x16x256xbf16, #tpu.memory_space<vmem>>) attributes {dimension_semantics = [#tpu.dimension_semantics<parallel>, #tpu.dimension_semantics<arbitrary>], iteration_bounds = array<i64: 1, 1>, scalar_prefetch = 0 : i64, scratch_operands = 1 : i64, tpu.core_type = #tpu.core_type<tc>, window_params = [{transform_indices = @transform_0, window_bounds = array<i64: 2, 16, 128>}, {pipeline_mode = #tpu.pipeline_mode<synchronous>, transform_indices = @transform_1, window_bounds = array<i64: 128, 256>}, {transform_indices = @transform_2, window_bounds = array<i64: 16, 16>}, {transform_indices = @transform_3, window_bounds = array<i64: 16, 16>}, {transform_indices = @transform_4, window_bounds = array<i64: 2, 16, 128>}]} {
    %c0_i32 = arith.constant 0 : i32
    %0 = arith.cmpi eq, %arg1, %c0_i32 : i32
    %1 = arith.extui %0 : i1 to i32
    %c0_i32_0 = arith.constant 0 : i32
    %2 = arith.cmpi ne, %1, %c0_i32_0 : i32
    scf.if %2 {
      %c0_18 = arith.constant 0 : index
      %c0_19 = arith.constant 0 : index
      %c0_20 = arith.constant 0 : index
      %25 = vector.load %arg2[%c0_18, %c0_19, %c0_20] : memref<2x16x128xbf16, #tpu.memory_space<vmem>>, vector<2x16x128xbf16>
      %26 = vector.shape_cast %25 : vector<2x16x128xbf16> to vector<32x128xbf16>
      %c0_21 = arith.constant 0 : index
      %c0_22 = arith.constant 0 : index
      %27 = vector.load %arg3[%c0_21, %c0_22] : memref<128x256xbf16, #tpu.memory_space<vmem>>, vector<128x256xbf16>
      %cst_23 = arith.constant dense<0.000000e+00> : vector<32x256xf32>
      %28 = tpu.matmul %26, %27, %cst_23 {dimension_numbers = #tpu.dot_dimension_numbers<[1], [0], [0], [1], [0, 0, 1, 1], [], []>} : vector<32x128xbf16>, vector<128x256xbf16>, vector<32x256xf32> -> vector<32x256xf32>
      %29 = vector.shape_cast %28 : vector<32x256xf32> to vector<2x16x256xf32>
      %30 = arith.truncf %29 : vector<2x16x256xf32> to vector<2x16x256xbf16>
      %c0_24 = arith.constant 0 : index
      %c0_25 = arith.constant 0 : index
      %c0_26 = arith.constant 0 : index
      %31 = vector.load %arg7[%c0_24, %c0_25, %c0_26] : memref<2x16x256xbf16, #tpu.memory_space<vmem>>, vector<2x16x256xbf16>
      tpu.vector_store %arg7[%c0_24, %c0_25, %c0_26], %30 {strides = array<i32>} : memref<2x16x256xbf16, #tpu.memory_space<vmem>>, vector<2x16x256xbf16>,
    } else {
    }
    %c0 = arith.constant 0 : index
    %c0_1 = arith.constant 0 : index
    %3 = vector.load %arg4[%c0, %c0_1] : memref<16x16xbf16, #tpu.memory_space<vmem>>, vector<16x16xbf16>
    %c0_2 = arith.constant 0 : index
    %c0_3 = arith.constant 0 : index
    %4 = vector.load %arg5[%c0_2, %c0_3] : memref<16x16xbf16, #tpu.memory_space<vmem>>, vector<16x16xbf16>
    %c0_4 = arith.constant 0 : index
    %c0_5 = arith.constant 0 : index
    %c0_6 = arith.constant 0 : index
    %5 = vector.load %arg7[%c0_4, %c0_5, %c0_6] : memref<2x16x256xbf16, #tpu.memory_space<vmem>>, vector<1x16x256xbf16>
    %6 = vector.shape_cast %5 : vector<1x16x256xbf16> to vector<16x256xbf16>
    %7 = vector.extract_strided_slice %6 {offsets = [0, 0], sizes = [16, 128], strides = [1, 1]} : vector<16x256xbf16> to vector<16x128xbf16>
    %8 = vector.extract_strided_slice %6 {offsets = [0, 128], sizes = [16, 128], strides = [1, 1]} : vector<16x256xbf16> to vector<16x128xbf16>
    %cst = arith.constant dense<0.000000e+00> : vector<16x128xf32>
    %9 = tpu.matmul %3, %7, %cst {dimension_numbers = #tpu.dot_dimension_numbers<[1], [0], [0], [1], [0, 0, 1, 1], [], []>} : vector<16x16xbf16>, vector<16x128xbf16>, vector<16x128xf32> -> vector<16x128xf32>
    %cst_7 = arith.constant dense<0.000000e+00> : vector<16x128xf32>
    %10 = tpu.matmul %4, %8, %cst_7 {dimension_numbers = #tpu.dot_dimension_numbers<[1], [0], [0], [1], [0, 0, 1, 1], [], []>} : vector<16x16xbf16>, vector<16x128xbf16>, vector<16x128xf32> -> vector<16x128xf32>
    %11 = arith.addf %9, %10 : vector<16x128xf32>
    %c0_8 = arith.constant 0 : index
    %c0_9 = arith.constant 0 : index
    %c0_10 = arith.constant 0 : index
    %12 = vector.load %arg6[%c0_8, %c0_9, %c0_10] : memref<2x16x128xf32, #tpu.memory_space<vmem>>, vector<1x16x128xf32>
    %13 = vector.shape_cast %12 : vector<1x16x128xf32> to vector<16x128xf32>
    %14 = vector.shape_cast %11 : vector<16x128xf32> to vector<1x16x128xf32>
    tpu.vector_store %arg6[%c0_8, %c0_9, %c0_10], %14 {strides = array<i32>} : memref<2x16x128xf32, #tpu.memory_space<vmem>>, vector<1x16x128xf32>,
    %c1 = arith.constant 1 : index
    %c0_11 = arith.constant 0 : index
    %c0_12 = arith.constant 0 : index
    %15 = vector.load %arg7[%c1, %c0_11, %c0_12] : memref<2x16x256xbf16, #tpu.memory_space<vmem>>, vector<1x16x256xbf16>
    %16 = vector.shape_cast %15 : vector<1x16x256xbf16> to vector<16x256xbf16>
    %17 = vector.extract_strided_slice %16 {offsets = [0, 0], sizes = [16, 128], strides = [1, 1]} : vector<16x256xbf16> to vector<16x128xbf16>
    %18 = vector.extract_strided_slice %16 {offsets = [0, 128], sizes = [16, 128], strides = [1, 1]} : vector<16x256xbf16> to vector<16x128xbf16>
    %cst_13 = arith.constant dense<0.000000e+00> : vector<16x128xf32>
    %19 = tpu.matmul %3, %17, %cst_13 {dimension_numbers = #tpu.dot_dimension_numbers<[1], [0], [0], [1], [0, 0, 1, 1], [], []>} : vector<16x16xbf16>, vector<16x128xbf16>, vector<16x128xf32> -> vector<16x128xf32>
    %cst_14 = arith.constant dense<0.000000e+00> : vector<16x128xf32>
    %20 = tpu.matmul %4, %18, %cst_14 {dimension_numbers = #tpu.dot_dimension_numbers<[1], [0], [0], [1], [0, 0, 1, 1], [], []>} : vector<16x16xbf16>, vector<16x128xbf16>, vector<16x128xf32> -> vector<16x128xf32>
    %21 = arith.addf %19, %20 : vector<16x128xf32>
    %c1_15 = arith.constant 1 : index
    %c0_16 = arith.constant 0 : index
    %c0_17 = arith.constant 0 : index
    %22 = vector.load %arg6[%c1_15, %c0_16, %c0_17] : memref<2x16x128xf32, #tpu.memory_space<vmem>>, vector<1x16x128xf32>
    %23 = vector.shape_cast %22 : vector<1x16x128xf32> to vector<16x128xf32>
    %24 = vector.shape_cast %21 : vector<16x128xf32> to vector<1x16x128xf32>
    tpu.vector_store %arg6[%c1_15, %c0_16, %c0_17], %24 {strides = array<i32>} : memref<2x16x128xf32, #tpu.memory_space<vmem>>, vector<1x16x128xf32>,
    return
  }
  func.func @transform_0(%arg0: i32, %arg1: i32) -> (i32, i32, i32) {
    %c0_i32 = arith.constant 0 : i32
    %c0_i32_0 = arith.constant 0 : i32
    %c0_i32_1 = arith.constant 0 : i32
    return %arg0, %c0_i32, %c0_i32_0 : i32, i32, i32
  }
  func.func @transform_1(%arg0: i32, %arg1: i32) -> (i32, i32) {
    %c0_i32 = arith.constant 0 : i32
    %c0_i32_0 = arith.constant 0 : i32
    %c0_i32_1 = arith.constant 0 : i32
    return %c0_i32, %c0_i32_0 : i32, i32
  }
  func.func @transform_2(%arg0: i32, %arg1: i32) -> (i32, i32) {
    %c0_i32 = arith.constant 0 : i32
    %c0_i32_0 = arith.constant 0 : i32
    return %arg1, %c0_i32 : i32, i32
  }
  func.func @transform_3(%arg0: i32, %arg1: i32) -> (i32, i32) {
    %c0_i32 = arith.constant 0 : i32
    %c0_i32_0 = arith.constant 0 : i32
    return %arg1, %c0_i32 : i32, i32
  }
  func.func @transform_4(%arg0: i32, %arg1: i32) -> (i32, i32, i32) {
    %c0_i32 = arith.constant 0 : i32
    %c0_i32_0 = arith.constant 0 : i32
    return %arg0, %arg1, %c0_i32 : i32, i32, i32
  }
}

</mosaic_0001>

<llo_original>
// kernel: tpu_custom_call.1
$region0: #{tpu_custom_call.1}
  #allocation0 [shape = 'u32[]', space=smem, size = 0x4, offset = 0x4, fixed_abs, tag = 'smem constant byte address 0x4 - core index']
  #allocation1 [shape = 'u32[144,128]{1,0:T(1,128)}', space=vmem, size = 0x12000, scoped, tag = 'internal scratch']
  #allocation2 [shape = 'bf16[2,16,256]{2,1,0:T(16,128)(2,1)}', space=vmem, size = 0x4000, scoped, tag = 'scratch operand']
  %s0 = inlined_call_operand.hbm [shape: bf16[2,16,128], index: 0, kind: input, shape index: {}]
  %s1 = inlined_call_operand.hbm [shape: bf16[128,256], index: 1, kind: input, shape index: {}]
  %s2 = inlined_call_operand.hbm [shape: bf16[16,16], index: 2, kind: input, shape index: {}]
  %s3 = inlined_call_operand.vmem [shape: bf16[16,16], index: 3, kind: input, shape index: {}]
  %s4 = inlined_call_operand.hbm [shape: f32[2,16,128], index: 4, kind: output, shape index: {}]
  %s5 = sld [smem:[#allocation0]]
  $region42: #{tpu_custom_call.1} parent=0
    _
  %s7 = ssub.s32 1, %s5
  %s8 = scalar_select 0, %s7, %s5
  $region1: #{tpu_custom_call.1} parent=0
    #allocation3 [shape = 'u8[8192]{0}', space=vmem, size = 0x2000, scoped, tag = 'input window, operand 0, single buffered']
    #allocation4 [shape = 's32[1]{0}', space=sflag, size = 0x4, scoped, tag = 'scoped memory for tpu_custom_call.1']
    #allocation5 [shape = 's32[1]{0}', space=sflag, size = 0x4, scoped, tag = 'scoped memory for tpu_custom_call.1']
    #allocation6 [shape = 'u8[65536]{0}', space=vmem, size = 0x10000, scoped, tag = 'input window, operand 1, single buffered']
    #allocation7 [shape = 's32[1]{0}', space=sflag, size = 0x4, scoped, tag = 'scoped memory for tpu_custom_call.1']
    #allocation8 [shape = 'u8[4096]{0}', space=vmem, size = 0x1000, scoped, tag = 'input window, operand 2, single buffered']
    #allocation9 [shape = 'u8[16384]{0}', space=vmem, size = 0x4000, scoped, tag = 'output window, operand 0, single buffered']
    %9 = vsyncpa [#allocation4], 0
    %10 = vsyncpa [#allocation7], 0
    %11 = vsyncpa [#allocation5], 0
    // Predicated region
    $region2: #{tpu_custom_call.1} parent=1 // pred_check
      _
    $region3: #{tpu_custom_call.1} parent=1 // pred_check_branch
      %13 = sbr.rel (0) target = $region5
    $region4: #{tpu_custom_call.1} parent=1 // pred_region
      %s15 = ssub.s32 256, 256
      %16 = vsyncadd [#allocation4], %s15
      %s17 = sshll.u32 [#allocation3], 4
      %s18 = int_to_ptr.vmem [resolvable:$true] %s17
      %23 = dma.hbm_to_vmem [thread:$0]  %s0, 256, %s18, [#allocation4], 64, 64, 4
    $region5: #{tpu_custom_call.1} parent=1 // pred_fallthru
      _
    // Predicated region
    $region6: #{tpu_custom_call.1} parent=1 // pred_check
      _
    $region7: #{tpu_custom_call.1} parent=1 // pred_check_branch
      %25 = sbr.rel (0) target = $region9
    $region8: #{tpu_custom_call.1} parent=1 // pred_region
      %s27 = ssub.s32 2048, 2048
      %28 = vsyncadd [#allocation7], %s27
      %s29 = sshll.u32 [#allocation6], 4
      %s30 = int_to_ptr.vmem [resolvable:$true] %s29
      %35 = dma.hbm_to_vmem [thread:$0]  %s1, 2048, %s30, [#allocation7], 128, 128, 8
    $region9: #{tpu_custom_call.1} parent=1 // pred_fallthru
      _
    // Predicated region
    $region10: #{tpu_custom_call.1} parent=1 // pred_check
      _
    $region11: #{tpu_custom_call.1} parent=1 // pred_check_branch
      %37 = sbr.rel (0) target = $region13
    $region12: #{tpu_custom_call.1} parent=1 // pred_region
      %s39 = ssub.s32 128, 128
      %40 = vsyncadd [#allocation7], %s39
      %s41 = sshll.u32 [#allocation8], 4
      %s42 = int_to_ptr.vmem [resolvable:$true] %s41
      %47 = dma.hbm_to_vmem [thread:$0]  %s2, 128, %s42, [#allocation7], 64, 64, 4
    $region13: #{tpu_custom_call.1} parent=1 // pred_fallthru
      _
    // Predicated region
    $region14: #{tpu_custom_call.1} parent=1 // pred_check
      _
    $region15: #{tpu_custom_call.1} parent=1 // pred_check_branch
      %49 = sbr.rel (0) target = $region17
    $region16: #{tpu_custom_call.1} parent=1 // pred_region
      _
    $region17: #{tpu_custom_call.1} parent=1 // pred_fallthru
      _
    // Predicated region
    $region18: #{tpu_custom_call.1} parent=1 // pred_check
      _
    $region19: #{tpu_custom_call.1} parent=1 // pred_check_branch
      %51 = sbr.rel (0) target = $region21
    $region20: #{tpu_custom_call.1} parent=1 // pred_region
      %52 = dma.done [#allocation4], 256
    $region21: #{tpu_custom_call.1} parent=1 // pred_fallthru
      _
    // Predicated region
    $region22: #{tpu_custom_call.1} parent=1 // pred_check
      _
    $region23: #{tpu_custom_call.1} parent=1 // pred_check_branch
      %54 = sbr.rel (0) target = $region25
    $region24: #{tpu_custom_call.1} parent=1 // pred_region
      %55 = dma.done [#allocation7], 2048
    $region25: #{tpu_custom_call.1} parent=1 // pred_fallthru
      _
    // Predicated region
    $region26: #{tpu_custom_call.1} parent=1 // pred_check
      _
    $region27: #{tpu_custom_call.1} parent=1 // pred_check_branch
      %57 = sbr.rel (0) target = $region29
    $region28: #{tpu_custom_call.1} parent=1 // pred_region
      %58 = dma.done [#allocation7], 128
    $region29: #{tpu_custom_call.1} parent=1 // pred_fallthru
      _
    %p60 = scmp.eq.s32.totalorder 0, 0
    // Predicated region
    $region30: #{tpu_custom_call.1} parent=1 // pred_check
      %p61 = pneg %p60
    $region31: #{tpu_custom_call.1} parent=1 // pred_check_branch
      %63 = sbr.rel (%p61) target = $region33
    $region32: #{tpu_custom_call.1} parent=1 // pred_region
      %v64 = vld [vmem:[#allocation3] sm:$0xf]
      %v65 = vld [vmem:[#allocation3 + $0x4] sm:$0xf]
      %v66 = vld [vmem:[#allocation3 + $0x8] sm:$0xf]
      %v67 = vld [vmem:[#allocation3 + $0xc] sm:$0xf]
      %v68 = vld [vmem:[#allocation6] sm:$0xff]
      %v69 = vld [vmem:[#allocation6 + $0x8] sm:$0xff]
      %v70 = vld [vmem:[#allocation6 + $0x10] sm:$0xff]
      %v71 = vld [vmem:[#allocation6 + $0x18] sm:$0xff]
      %v72 = vld [vmem:[#allocation6 + $0x20] sm:$0xff]
      %v73 = vld [vmem:[#allocation6 + $0x28] sm:$0xff]
      %v74 = vld [vmem:[#allocation6 + $0x30] sm:$0xff]
      %v75 = vld [vmem:[#allocation6 + $0x38] sm:$0xff]
      %v76 = vld [vmem:[#allocation6 + $0x40] sm:$0xff]
      %v77 = vld [vmem:[#allocation6 + $0x48] sm:$0xff]
      %v78 = vld [vmem:[#allocation6 + $0x50] sm:$0xff]
      %v79 = vld [vmem:[#allocation6 + $0x58] sm:$0xff]
      %v80 = vld [vmem:[#allocation6 + $0x60] sm:$0xff]
      %v81 = vld [vmem:[#allocation6 + $0x68] sm:$0xff]
      %v82 = vld [vmem:[#allocation6 + $0x70] sm:$0xff]
      %v83 = vld [vmem:[#allocation6 + $0x78] sm:$0xff]
      %v88 = vunpack.c.l.b16 %v64
      %v89 = vunpack.c.l.b16 %v65
      %v90 = vunpack.c.l.b16 %v66
      %v91 = vunpack.c.l.b16 %v67
      %v92 = vpack.c.b16 %v89, %v88
      %v93 = vpack.c.b16 %v91, %v90
      %v112 = vunpack.c.l.b16 %v68
      %v113 = vunpack.c.h.b16 %v68
      %v114 = vunpack.c.l.b16 %v69
      %v115 = vunpack.c.h.b16 %v69
      %v116 = vunpack.c.l.b16 %v70
      %v117 = vunpack.c.h.b16 %v70
      %v118 = vunpack.c.l.b16 %v71
      %v119 = vunpack.c.h.b16 %v71
      %v120 = vunpack.c.l.b16 %v72
      %v121 = vunpack.c.h.b16 %v72
      %v122 = vunpack.c.l.b16 %v73
      %v123 = vunpack.c.h.b16 %v73
      %v124 = vunpack.c.l.b16 %v74
      %v125 = vunpack.c.h.b16 %v74
      %v126 = vunpack.c.l.b16 %v75
      %v127 = vunpack.c.h.b16 %v75
      %v128 = vunpack.c.l.b16 %v76
      %v129 = vunpack.c.h.b16 %v76
      %v130 = vunpack.c.l.b16 %v77
      %v131 = vunpack.c.h.b16 %v77
      %v132 = vunpack.c.l.b16 %v78
      %v133 = vunpack.c.h.b16 %v78
      %v134 = vunpack.c.l.b16 %v79
      %v135 = vunpack.c.h.b16 %v79
      %v136 = vunpack.c.l.b16 %v80
      %v137 = vunpack.c.h.b16 %v80
      %v138 = vunpack.c.l.b16 %v81
      %v139 = vunpack.c.h.b16 %v81
      %v140 = vunpack.c.l.b16 %v82
      %v141 = vunpack.c.h.b16 %v82
      %v142 = vunpack.c.l.b16 %v83
      %v143 = vunpack.c.h.b16 %v83
      %v144 = vpack.c.b16 %v114, %v112
      %v145 = vpack.c.b16 %v115, %v113
      %v146 = vpack.c.b16 %v118, %v116
      %v147 = vpack.c.b16 %v119, %v117
      %v148 = vpack.c.b16 %v122, %v120
      %v149 = vpack.c.b16 %v123, %v121
      %v150 = vpack.c.b16 %v126, %v124
      %v151 = vpack.c.b16 %v127, %v125
      %v152 = vpack.c.b16 %v130, %v128
      %v153 = vpack.c.b16 %v131, %v129
      %v154 = vpack.c.b16 %v134, %v132
      %v155 = vpack.c.b16 %v135, %v133
      %v156 = vpack.c.b16 %v138, %v136
      %v157 = vpack.c.b16 %v139, %v137
      %v158 = vpack.c.b16 %v142, %v140
      %v159 = vpack.c.b16 %v143, %v141
      %176 = vmatprep.subr.bf16.mxu0 %v145
      %177 = vmatpush1.bf16.msra.mxu0 %v144
      %178 = vmatprep.subr.bf16.mxu0 %v147
      %179 = vmatpush1.bf16.msra.mxu0 %v146
      %180 = vmatprep.subr.bf16.mxu0 %v149
      %181 = vmatpush1.bf16.msra.mxu0 %v148
      %182 = vmatprep.subr.bf16.mxu0 %v151
      %183 = vmatpush1.bf16.msra.mxu0 %v150
      %184 = vmatprep.subr.bf16.mxu0 %v153
      %185 = vmatpush1.bf16.msra.mxu0 %v152
      %186 = vmatprep.subr.bf16.mxu0 %v155
      %187 = vmatpush1.bf16.msra.mxu0 %v154
      %188 = vmatprep.subr.bf16.mxu0 %v157
      %189 = vmatpush1.bf16.msra.mxu0 %v156
      %190 = vmatprep.subr.bf16.mxu0 %v159
      %191 = vmatpush1.bf16.msra.mxu0 %v158
      %192 = vmatprep.subr.bf16.mxu0 0
      %193 = vmatpush1.bf16.msra.mxu0 0
      %194 = vmatprep.subr.bf16.mxu0 0
      %195 = vmatpush1.bf16.msra.mxu0 0
      %196 = vmatprep.subr.bf16.mxu0 0
      %197 = vmatpush1.bf16.msra.mxu0 0
      %198 = vmatprep.subr.bf16.mxu0 0
      %199 = vmatpush1.bf16.msra.mxu0 0
      %200 = vmatprep.subr.bf16.mxu0 0
      %201 = vmatpush1.bf16.msra.mxu0 0
      %202 = vmatprep.subr.bf16.mxu0 0
      %203 = vmatpush1.bf16.msra.mxu0 0
      %204 = vmatprep.subr.bf16.mxu0 0
      %205 = vmatpush1.bf16.msra.mxu0 0
      %206 = vmatprep.subr.bf16.mxu0 0
      %207 = vmatpush1.bf16.msra.mxu0 0
      %208 = vmatprep.mubr.bf16.mxu0 0
      %209 = vmatmul.mubr.bf16.gmra.mrb[0].mxu0 %v92
      %v210 = vpop.f32.mrb[0].mxu0
      %v211 = vadd.f32 0.0, %v210
      %v212 = vpop.f32.mrb[0].mxu0
      %v213 = vadd.f32 0.0, %v212
      %v214 = vpop.f32.mrb[0].mxu0
      %v215 = vadd.f32 0.0, %v214
      %v216 = vpop.f32.mrb[0].mxu0
      %v217 = vadd.f32 0.0, %v216
      %218 = vmatprep.mubr.bf16.mxu0 0
      %219 = vmatmul.mubr.bf16.gmra.mrb[0].mxu0 %v93
      %v220 = vpop.f32.mrb[0].mxu0
      %v221 = vadd.f32 0.0, %v220
      %v222 = vpop.f32.mrb[0].mxu0
      %v223 = vadd.f32 0.0, %v222
      %v224 = vpop.f32.mrb[0].mxu0
      %v225 = vadd.f32 0.0, %v224
      %v226 = vpop.f32.mrb[0].mxu0
      %v227 = vadd.f32 0.0, %v226
      %228 = vdwg.mxu0
      %v229 = vpack.c.bf16 %v215, %v211
      %v230 = vpack.c.bf16 %v217, %v213
      %v231 = vpack.c.bf16 %v225, %v221
      %v232 = vpack.c.bf16 %v227, %v223
      %233 = vst [vmem:[#allocation2] sm:$0xff] %v229
      %234 = vst [vmem:[#allocation2 + $0x8] sm:$0xff] %v230
      %235 = vst [vmem:[#allocation2 + $0x10] sm:$0xff] %v231
      %236 = vst [vmem:[#allocation2 + $0x18] sm:$0xff] %v232
    $region33: #{tpu_custom_call.1} parent=1 // pred_fallthru
      _
    %v237 = vld [vmem:[#allocation8] sm:$0xf]
    %v238 = vld [vmem:[#allocation8 + $0x4] sm:$0xf]
    %v239 = vld [vmem:[%s3] sm:$0xf]
    %v240 = vld [vmem:[%s3 + $0x4] sm:$0xf]
    %v241 = vld [vmem:[#allocation2] sm:$0xff]
    %v242 = vld [vmem:[#allocation2 + $0x8] sm:$0xff]
    %v245 = vunpack.c.l.b16 %v239
    %v246 = vunpack.c.l.b16 %v240
    %v247 = vpack.c.b16 %v246, %v245
    %vm248 = vcmask 130048
    %v250 = vsel %vm248, %v247, 0
    %252 = vmatprep.subr.bf16.mxu0 0
    %253 = vmatpush1.bf16.msra.mxu0 %v242
    %254 = vmatprep.subr.bf16.mxu0 0
    %255 = vmatpush1.bf16.msra.mxu0 0
    %256 = vmatprep.subr.bf16.mxu0 0
    %257 = vmatpush1.bf16.msra.mxu0 0
    %258 = vmatprep.subr.bf16.mxu0 0
    %259 = vmatpush1.bf16.msra.mxu0 0
    %260 = vmatprep.subr.bf16.mxu0 0
    %261 = vmatpush1.bf16.msra.mxu0 0
    %262 = vmatprep.subr.bf16.mxu0 0
    %263 = vmatpush1.bf16.msra.mxu0 0
    %264 = vmatprep.subr.bf16.mxu0 0
    %265 = vmatpush1.bf16.msra.mxu0 0
    %266 = vmatprep.subr.bf16.mxu0 0
    %267 = vmatpush1.bf16.msra.mxu0 0
    %268 = vmatprep.subr.bf16.mxu0 0
    %269 = vmatpush1.bf16.msra.mxu0 0
    %270 = vmatprep.subr.bf16.mxu0 0
    %271 = vmatpush1.bf16.msra.mxu0 0
    %272 = vmatprep.subr.bf16.mxu0 0
    %273 = vmatpush1.bf16.msra.mxu0 0
    %274 = vmatprep.subr.bf16.mxu0 0
    %275 = vmatpush1.bf16.msra.mxu0 0
    %276 = vmatprep.subr.bf16.mxu0 0
    %277 = vmatpush1.bf16.msra.mxu0 0
    %278 = vmatprep.subr.bf16.mxu0 0
    %279 = vmatpush1.bf16.msra.mxu0 0
    %280 = vmatprep.subr.bf16.mxu0 0
    %281 = vmatpush1.bf16.msra.mxu0 0
    %282 = vmatprep.subr.bf16.mxu0 0
    %283 = vmatpush1.bf16.msra.mxu0 0
    %284 = vmatprep.mubr.bf16.mxu0 0
    %285 = vmatmul.mubr.bf16.gmra.mrb[0].mxu0 %v250
    %v286 = vpop.f32.mrb[0].mxu0
    %v287 = vadd.f32 0.0, %v286
    %v288 = vpop.f32.mrb[0].mxu0
    %v289 = vpop.f32.mrb[0].mxu0
    %v290 = vadd.f32 0.0, %v289
    %v291 = vpop.f32.mrb[0].mxu0
    %292 = vdwg.mxu0
    %v295 = vunpack.c.l.b16 %v237
    %v296 = vunpack.c.l.b16 %v238
    %v297 = vpack.c.b16 %v296, %v295
    %v299 = vsel %vm248, %v297, 0
    %301 = vmatprep.subr.bf16.mxu0 0
    %302 = vmatpush1.bf16.msra.mxu0 %v241
    %303 = vmatprep.subr.bf16.mxu0 0
    %304 = vmatpush1.bf16.msra.mxu0 0
    %305 = vmatprep.subr.bf16.mxu0 0
    %306 = vmatpush1.bf16.msra.mxu0 0
    %307 = vmatprep.subr.bf16.mxu0 0
    %308 = vmatpush1.bf16.msra.mxu0 0
    %309 = vmatprep.subr.bf16.mxu0 0
    %310 = vmatpush1.bf16.msra.mxu0 0
    %311 = vmatprep.subr.bf16.mxu0 0
    %312 = vmatpush1.bf16.msra.mxu0 0
    %313 = vmatprep.subr.bf16.mxu0 0
    %314 = vmatpush1.bf16.msra.mxu0 0
    %315 = vmatprep.subr.bf16.mxu0 0
    %316 = vmatpush1.bf16.msra.mxu0 0
    %317 = vmatprep.subr.bf16.mxu0 0
    %318 = vmatpush1.bf16.msra.mxu0 0
    %319 = vmatprep.subr.bf16.mxu0 0
    %320 = vmatpush1.bf16.msra.mxu0 0
    %321 = vmatprep.subr.bf16.mxu0 0
    %322 = vmatpush1.bf16.msra.mxu0 0
    %323 = vmatprep.subr.bf16.mxu0 0
    %324 = vmatpush1.bf16.msra.mxu0 0
    %325 = vmatprep.subr.bf16.mxu0 0
    %326 = vmatpush1.bf16.msra.mxu0 0
    %327 = vmatprep.subr.bf16.mxu0 0
    %328 = vmatpush1.bf16.msra.mxu0 0
    %329 = vmatprep.subr.bf16.mxu0 0
    %330 = vmatpush1.bf16.msra.mxu0 0
    %331 = vmatprep.subr.bf16.mxu0 0
    %332 = vmatpush1.bf16.msra.mxu0 0
    %333 = vmatprep.mubr.bf16.mxu0 0
    %334 = vmatmul.mubr.bf16.gmra.mrb[0].mxu0 %v299
    %v335 = vpop.f32.mrb[0].mxu0
    %v336 = vadd.f32 %v287, %v335
    %v337 = vpop.f32.mrb[0].mxu0
    %v338 = vpop.f32.mrb[0].mxu0
    %v339 = vadd.f32 %v290, %v338
    %v340 = vpop.f32.mrb[0].mxu0
    %341 = vdwg.mxu0
    %342 = vst [vmem:[#allocation9] sm:$0xff] %v336
    %343 = vst [vmem:[#allocation9 + $0x8] sm:$0xff] %v339
    %s344 = scalar_lea.vmem [#allocation2], 16
    %v345 = vld [vmem:[%s344] sm:$0xff]
    %v346 = vld [vmem:[%s344 + $0x8] sm:$0xff]
    %347 = vmatprep.subr.bf16.mxu0 0
    %348 = vmatpush1.bf16.msra.mxu0 %v346
    %349 = vmatprep.subr.bf16.mxu0 0
    %350 = vmatpush1.bf16.msra.mxu0 0
    %351 = vmatprep.subr.bf16.mxu0 0
    %352 = vmatpush1.bf16.msra.mxu0 0
    %353 = vmatprep.subr.bf16.mxu0 0
    %354 = vmatpush1.bf16.msra.mxu0 0
    %355 = vmatprep.subr.bf16.mxu0 0
    %356 = vmatpush1.bf16.msra.mxu0 0
    %357 = vmatprep.subr.bf16.mxu0 0
    %358 = vmatpush1.bf16.msra.mxu0 0
    %359 = vmatprep.subr.bf16.mxu0 0
    %360 = vmatpush1.bf16.msra.mxu0 0
    %361 = vmatprep.subr.bf16.mxu0 0
    %362 = vmatpush1.bf16.msra.mxu0 0
    %363 = vmatprep.subr.bf16.mxu0 0
    %364 = vmatpush1.bf16.msra.mxu0 0
    %365 = vmatprep.subr.bf16.mxu0 0
    %366 = vmatpush1.bf16.msra.mxu0 0
    %367 = vmatprep.subr.bf16.mxu0 0
    %368 = vmatpush1.bf16.msra.mxu0 0
    %369 = vmatprep.subr.bf16.mxu0 0
    %370 = vmatpush1.bf16.msra.mxu0 0
    %371 = vmatprep.subr.bf16.mxu0 0
    %372 = vmatpush1.bf16.msra.mxu0 0
    %373 = vmatprep.subr.bf16.mxu0 0
    %374 = vmatpush1.bf16.msra.mxu0 0
    %375 = vmatprep.subr.bf16.mxu0 0
    %376 = vmatpush1.bf16.msra.mxu0 0
    %377 = vmatprep.subr.bf16.mxu0 0
    %378 = vmatpush1.bf16.msra.mxu0 0
    %379 = vmatprep.mubr.bf16.mxu0 0
    %380 = vmatmul.mubr.bf16.gmra.mrb[0].mxu0 %v250
    %v381 = vpop.f32.mrb[0].mxu0
    %v382 = vadd.f32 0.0, %v381
    %v383 = vpop.f32.mrb[0].mxu0
    %v384 = vpop.f32.mrb[0].mxu0
    %v385 = vadd.f32 0.0, %v384
    %v386 = vpop.f32.mrb[0].mxu0
    %387 = vdwg.mxu0
    %388 = vmatprep.subr.bf16.mxu0 0
    %389 = vmatpush1.bf16.msra.mxu0 %v345
    %390 = vmatprep.subr.bf16.mxu0 0
    %391 = vmatpush1.bf16.msra.mxu0 0
    %392 = vmatprep.subr.bf16.mxu0 0
    %393 = vmatpush1.bf16.msra.mxu0 0
    %394 = vmatprep.subr.bf16.mxu0 0
    %395 = vmatpush1.bf16.msra.mxu0 0
    %396 = vmatprep.subr.bf16.mxu0 0
    %397 = vmatpush1.bf16.msra.mxu0 0
    %398 = vmatprep.subr.bf16.mxu0 0
    %399 = vmatpush1.bf16.msra.mxu0 0
    %400 = vmatprep.subr.bf16.mxu0 0
    %401 = vmatpush1.bf16.msra.mxu0 0
    %402 = vmatprep.subr.bf16.mxu0 0
    %403 = vmatpush1.bf16.msra.mxu0 0
    %404 = vmatprep.subr.bf16.mxu0 0
    %405 = vmatpush1.bf16.msra.mxu0 0
    %406 = vmatprep.subr.bf16.mxu0 0
    %407 = vmatpush1.bf16.msra.mxu0 0
    %408 = vmatprep.subr.bf16.mxu0 0
    %409 = vmatpush1.bf16.msra.mxu0 0
    %410 = vmatprep.subr.bf16.mxu0 0
    %411 = vmatpush1.bf16.msra.mxu0 0
    %412 = vmatprep.subr.bf16.mxu0 0
    %413 = vmatpush1.bf16.msra.mxu0 0
    %414 = vmatprep.subr.bf16.mxu0 0
    %415 = vmatpush1.bf16.msra.mxu0 0
    %416 = vmatprep.subr.bf16.mxu0 0
    %417 = vmatpush1.bf16.msra.mxu0 0
    %418 = vmatprep.subr.bf16.mxu0 0
    %419 = vmatpush1.bf16.msra.mxu0 0
    %420 = vmatprep.mubr.bf16.mxu0 0
    %421 = vmatmul.mubr.bf16.gmra.mrb[0].mxu0 %v299
    %v422 = vpop.f32.mrb[0].mxu0
    %v423 = vadd.f32 %v382, %v422
    %v424 = vpop.f32.mrb[0].mxu0
    %v425 = vpop.f32.mrb[0].mxu0
    %v426 = vadd.f32 %v385, %v425
    %v427 = vpop.f32.mrb[0].mxu0
    %428 = vdwg.mxu0
    %s429 = scalar_lea.vmem [#allocation9], 16
    %430 = vst [vmem:[%s429] sm:$0xff] %v423
    %431 = vst [vmem:[%s429 + $0x8] sm:$0xff] %v426
    // Predicated region
    $region34: #{tpu_custom_call.1} parent=1 // pred_check
      _
    $region35: #{tpu_custom_call.1} parent=1 // pred_check_branch
      %433 = sbr.rel (0) target = $region37
    $region36: #{tpu_custom_call.1} parent=1 // pred_region
      %s435 = ssub.s32 512, 512
      %436 = vsyncadd [#allocation5], %s435
      %s437 = sshll.u32 [#allocation9], 4
      %s438 = int_to_ptr.vmem [resolvable:$true] %s437
      %443 = dma.vmem_to_hbm [thread:$0]  %s438, 512, %s4, [#allocation5], 128, 128, 8
    $region37: #{tpu_custom_call.1} parent=1 // pred_fallthru
      _
    // Predicated region
    $region38: #{tpu_custom_call.1} parent=1 // pred_check
      _
    $region39: #{tpu_custom_call.1} parent=1 // pred_check_branch
      %445 = sbr.rel (0) target = $region41
    $region40: #{tpu_custom_call.1} parent=1 // pred_region
      %446 = dma.done [#allocation5], 512
    $region41: #{tpu_custom_call.1} parent=1 // pred_fallthru
      _
    %447 = vsyncpa [#allocation4], 1
    %448 = vsyncpa [#allocation7], 1
    %449 = vsyncpa [#allocation5], 1

</llo_original>
